<compile_context>
chip_gen: v6e
topology: v6e:2x2x1
jax: 0.10.0
libtpu: 0.0.40
codegen_flags: <defaults>
</compile_context>

<pallas_src>
import functools

import jax
import jax.numpy as jnp
from jax.experimental import pallas as pl
from jax.experimental.pallas import tpu as pltpu


# ----------------------------------------------------------------------------
# In-kernel math helpers
# ----------------------------------------------------------------------------
_INV_SQRT2 = 0.7071067811865476


def _erf(x):
    # Abramowitz & Stegun 7.1.26 polynomial erf approximation, |err| <= 1.5e-7.
    # Uses only mul/add/abs/select/div + one exp (EUP), so it lowers everywhere.
    a1, a2, a3, a4, a5 = (0.254829592, -0.284496736, 1.421413741,
                          -1.453152027, 1.061405429)
    p = 0.3275911
    ax = jnp.abs(x)
    t = 1.0 / (1.0 + p * ax)
    poly = ((((a5 * t + a4) * t + a3) * t + a2) * t + a1) * t
    y = 1.0 - poly * jnp.exp(-ax * ax)
    return jnp.where(x < 0, -y, y)


def _gelu(x):
    # Exact (erf) GELU, matching torch.nn.functional.gelu's default form.
    return 0.5 * x * (1.0 + _erf(x * _INV_SQRT2))


# ----------------------------------------------------------------------------
# Kernel
# ----------------------------------------------------------------------------
def _mlp_kernel(*refs, nlayers):
    # refs = (x_ref, w_0..w_{L-1}, b_0..b_{L-1}, o_ref)
    x_ref = refs[0]
    w_refs = refs[1:1 + nlayers]
    b_refs = refs[1 + nlayers:1 + 2 * nlayers]
    o_ref = refs[1 + 2 * nlayers]

    h = x_ref[...]                                   # bf16 activation slab
    for i in range(nlayers):                         # static loop -> fully fused
        # bf16 operands into the MXU, f32 accumulator out.
        acc = jnp.dot(h.astype(jnp.bfloat16), w_refs[i][...],
                      preferred_element_type=jnp.float32)
        acc = acc + b_refs[i][...]                   # (1, d) f32 bias broadcast
        if i < nlayers - 1:
            acc = _gelu(acc)                         # exact-erf GELU in f32
        h = acc
    o_ref[...] = h.astype(o_ref.dtype)


# ----------------------------------------------------------------------------
# Wrapper
# ----------------------------------------------------------------------------
def _round_up(x, m):
    return (x + m - 1) // m * m


def _vmem_capacity_bytes():
    try:
        return int(pltpu.get_tpu_info().vmem_capacity_bytes)
    except Exception:
        return 64 * 1024 * 1024           # conservative: v7x per-TensorCore VMEM


def _choose_block_m(batch, dims_p, vmem_budget):
    """Pick a 16-row-aligned batch tile BM under the VMEM budget.

    Prefers >= 4 grid steps (>= 2 per v7x TensorCore, so prefetch of step i+1
    can overlap compute of step i on each core) once the batch is large, while
    never fragmenting below MIN_BM rows just to add steps.
    """
    ALIGN = 16          # bf16 activation tiles pack 16 rows per (16,128) vreg
    MIN_BM = 256        # per-step overhead (~0.35us) dominates below this
    TARGET_STEPS = 4    # >= 2 steps per TensorCore on v7x megacore
    MAX_BM = 2048

    # BM-independent bytes: bf16 weights + f32 biases, counted double-buffered
    # (Pallas allocates 2 buffers per input even for grid-invariant blocks).
    static = 2 * sum(2 * di * do + 4 * do
                     for di, do in zip(dims_p[:-1], dims_p[1:]))
    # BM-proportional bytes: double-buffered bf16 input / f32 output slabs plus
    # the widest per-layer live set (bf16 dot operand + f32 h + f32 accumulator).
    per_row = 2 * 2 * dims_p[0] + 2 * 4 * dims_p[-1]
    per_row += max((2 + 4) * di + 4 * do
                   for di, do in zip(dims_p[:-1], dims_p[1:]))

    avail = vmem_budget - static
    if avail < ALIGN * per_row:
        # TODO(synk): add a K/N-tiled weight-streaming fallback (extra
        # "arbitrary" grid axes + f32 accumulator scratch) for MLPs whose
        # weights do not fit VMEM, instead of requiring full residency.
        raise ValueError(
            f"MLP weights ({static} B) do not fit the VMEM budget "
            f"({vmem_budget} B); weight-streaming fallback not implemented.")

    bm_cap = min(MAX_BM, (avail // per_row) // ALIGN * ALIGN)
    batch_a = _round_up(batch, ALIGN)
    if batch_a <= bm_cap and batch_a < TARGET_STEPS * MIN_BM:
        return batch_a                               # small batch: one/few steps
    want = _round_up(-(-batch_a // TARGET_STEPS), ALIGN)
    return max(ALIGN, min(bm_cap, max(MIN_BM, want)))


def mlp_forward(x, weights, biases, *, block_m=None, interpret=False):
    """Pallas forward pass of MLP: (Linear -> GELU) x (L-1), then Linear."""
    assert len(weights) == len(biases) and len(weights) >= 1
    batch, ninput = x.shape
    nlayers = len(weights)
    dims = [ninput] + [int(w.shape[1]) for w in weights]
    noutput = dims[-1]
    out_dtype = x.dtype

    # Lane-dense padding of every feature dim to a multiple of 128.
    LANE = 128
    dims_p = [_round_up(d, LANE) for d in dims]

    # Generation-aware VMEM budget / limit (64 MiB v7x, 128 MiB v5e/v6e).
    vmem_cap = _vmem_capacity_bytes()
    vmem_budget = int(vmem_cap * 0.70)
    vmem_limit = int(vmem_cap * 0.85)

    bm = block_m or _choose_block_m(batch, dims_p, vmem_budget)
    batch_p = _round_up(batch, bm)
    grid = (batch_p // bm,)

    # Pad + cast operands: bf16 into the MXU, f32 biases for the f32 epilogue.
    x_p = jnp.zeros((batch_p, dims_p[0]), jnp.bfloat16)
    x_p = x_p.at[:batch, :ninput].set(x.astype(jnp.bfloat16))
    ws_p, bs_p = [], []
    for i, (w, b) in enumerate(zip(weights, biases)):
        wp = jnp.zeros((dims_p[i], dims_p[i + 1]), jnp.bfloat16)
        wp = wp.at[:dims[i], :dims[i + 1]].set(w.astype(jnp.bfloat16))
        bp = jnp.zeros((1, dims_p[i + 1]), jnp.float32)
        bp = bp.at[0, :dims[i + 1]].set(b.astype(jnp.float32))
        ws_p.append(wp)
        bs_p.append(bp)

    in_specs = [pl.BlockSpec((bm, dims_p[0]), lambda i: (i, 0))]
    # Constant index maps -> weights/biases stay VMEM-resident across the grid
    # (Pallas skips the re-DMA when the block index does not change).
    # TODO(synk): add pipeline_mode=pl.Buffered(1) to these grid-invariant specs
    # once single-buffering is confirmed stable on the deployed jax build; it
    # halves the resident-weight footprint (matters most on v7x's 64 MiB VMEM).
    in_specs += [pl.BlockSpec(w.shape, lambda i: (0, 0)) for w in ws_p]
    in_specs += [pl.BlockSpec(b.shape, lambda i: (0, 0)) for b in bs_p]

    flops = 2 * batch_p * sum(di * do for di, do in zip(dims_p[:-1], dims_p[1:]))
    transcendentals = batch_p * sum(dims_p[1:-1])    # ~one exp per GELU element
    bytes_accessed = (x_p.size * 2
                      + sum(w.size * 2 for w in ws_p)
                      + sum(b.size * 4 for b in bs_p)
                      + batch_p * dims_p[-1] * jnp.dtype(out_dtype).itemsize)

    out_p = pl.pallas_call(
        functools.partial(_mlp_kernel, nlayers=nlayers),
        out_shape=jax.ShapeDtypeStruct((batch_p, dims_p[-1]), out_dtype),
        grid_spec=pltpu.PrefetchScalarGridSpec(
            num_scalar_prefetch=0,
            grid=grid,
            in_specs=in_specs,
            out_specs=pl.BlockSpec((bm, dims_p[-1]), lambda i: (i, 0)),
        ),
        compiler_params=pltpu.CompilerParams(
            dimension_semantics=("parallel",),
            vmem_limit_bytes=vmem_limit,
        ),
        cost_estimate=pl.CostEstimate(
            flops=flops,
            transcendentals=transcendentals,
            bytes_accessed=bytes_accessed),
        interpret=interpret,
    )(x_p, *ws_p, *bs_p)

    return out_p[:batch, :noutput]


# ----------------------------------------------------------------------------
# Plain-JAX reference (mirrors the torch forward: exact-erf GELU).
# ----------------------------------------------------------------------------
def mlp_reference(x, weights, biases, *, emulate_bf16_inputs=False):
    def to_mxu(a):
        if emulate_bf16_inputs:
            return a.astype(jnp.bfloat16).astype(jnp.float32)
        return a.astype(jnp.float32)

    h = x.astype(jnp.float32)
    for i in range(len(weights)):
        h = jnp.dot(to_mxu(h), to_mxu(weights[i]),
                    preferred_element_type=jnp.float32,
                    precision=jax.lax.Precision.HIGHEST)
        h = h + biases[i].astype(jnp.float32)
        if i < len(weights) - 1:
            h = jax.nn.gelu(h, approximate=False)   # torch default (erf) form
    return h


if __name__ == "__main__":
    key = jax.random.PRNGKey(0)

    def make_params(key, dims):
        ws, bs = [], []
        for din, dout in zip(dims[:-1], dims[1:]):
            key, kw, kb = jax.random.split(key, 3)
            scale = 1.0 / float(din) ** 0.5
            ws.append(jax.random.uniform(kw, (din, dout), jnp.float32, -scale, scale))
            bs.append(jax.random.uniform(kb, (dout,), jnp.float32, -scale, scale))
        return key, ws, bs

    # MLP(ninput=16, nh=32, noutput=8, nlayers=3) on a batch of 16 rows.
    batch, ninput, nh, noutput, nlayers = 16, 16, 32, 8, 3
    dims = [ninput] + [nh] * (nlayers - 1) + [noutput]
    key, ws, bs = make_params(key, dims)
    key, kx = jax.random.split(key)
    x = jax.random.normal(kx, (batch, ninput), dtype=jnp.float32)

    out = jax.block_until_ready(mlp_forward(x, ws, bs))
    assert out.shape == (batch, noutput), out.shape

    # Tight check vs a reference that mirrors the kernel's bf16-operand numerics.
    ref_bf16 = mlp_reference(x, ws, bs, emulate_bf16_inputs=True)
    err = float(jnp.max(jnp.abs(out - ref_bf16)))
    assert jnp.allclose(out, ref_bf16, rtol=2e-3, atol=2e-3), err
    # Looser check vs the exact f32 / erf-GELU forward (torch semantics).
    ref_f32 = mlp_reference(x, ws, bs)
    assert jnp.allclose(out, ref_f32, rtol=3e-2, atol=3e-2), \
        float(jnp.max(jnp.abs(out - ref_f32)))

    # nlayers == 1 path: a single Linear, no GELU.
    key, ws1, bs1 = make_params(key, [ninput, noutput])
    out1 = jax.block_until_ready(mlp_forward(x, ws1, bs1))
    ref1 = mlp_reference(x, ws1, bs1, emulate_bf16_inputs=True)
    assert out1.shape == (batch, noutput), out1.shape
    assert jnp.allclose(out1, ref1, rtol=2e-3, atol=2e-3)

    print("KERNEL_OK")
</pallas_src>

<mosaic_0001>
module attributes {stable_mosaic.version = 11 : i64} {
  func.func @_mlp_kernel(%arg0: i32, %arg1: memref<16x128xbf16, #tpu.memory_space<vmem>>, %arg2: memref<128x128xbf16, #tpu.memory_space<vmem>>, %arg3: memref<128x128xbf16, #tpu.memory_space<vmem>>, %arg4: memref<128x128xbf16, #tpu.memory_space<vmem>>, %arg5: memref<1x128xf32, #tpu.memory_space<vmem>>, %arg6: memref<1x128xf32, #tpu.memory_space<vmem>>, %arg7: memref<1x128xf32, #tpu.memory_space<vmem>>, %arg8: memref<16x128xf32, #tpu.memory_space<vmem>>) attributes {dimension_semantics = [#tpu.dimension_semantics<parallel>], iteration_bounds = array<i64: 1>, scalar_prefetch = 0 : i64, scratch_operands = 0 : i64, tpu.core_type = #tpu.core_type<tc>, window_params = [{transform_indices = @transform_0, window_bounds = array<i64: 16, 128>}, {pipeline_mode = #tpu.pipeline_mode<synchronous>, transform_indices = @transform_1, window_bounds = array<i64: 128, 128>}, {pipeline_mode = #tpu.pipeline_mode<synchronous>, transform_indices = @transform_2, window_bounds = array<i64: 128, 128>}, {pipeline_mode = #tpu.pipeline_mode<synchronous>, transform_indices = @transform_3, window_bounds = array<i64: 128, 128>}, {pipeline_mode = #tpu.pipeline_mode<synchronous>, transform_indices = @transform_4, window_bounds = array<i64: 1, 128>}, {pipeline_mode = #tpu.pipeline_mode<synchronous>, transform_indices = @transform_5, window_bounds = array<i64: 1, 128>}, {pipeline_mode = #tpu.pipeline_mode<synchronous>, transform_indices = @transform_6, window_bounds = array<i64: 1, 128>}, {transform_indices = @transform_7, window_bounds = array<i64: 16, 128>}]} {
    %c0 = arith.constant 0 : index
    %c0_0 = arith.constant 0 : index
    %0 = vector.load %arg1[%c0, %c0_0] : memref<16x128xbf16, #tpu.memory_space<vmem>>, vector<16x128xbf16>
    %c0_1 = arith.constant 0 : index
    %c0_2 = arith.constant 0 : index
    %1 = vector.load %arg2[%c0_1, %c0_2] : memref<128x128xbf16, #tpu.memory_space<vmem>>, vector<128x128xbf16>
    %cst = arith.constant dense<0.000000e+00> : vector<16x128xf32>
    %2 = tpu.matmul %0, %1, %cst {dimension_numbers = #tpu.dot_dimension_numbers<[1], [0], [0], [1], [0, 0, 1, 1], [], []>} : vector<16x128xbf16>, vector<128x128xbf16>, vector<16x128xf32> -> vector<16x128xf32>
    %c0_3 = arith.constant 0 : index
    %c0_4 = arith.constant 0 : index
    %3 = vector.load %arg5[%c0_3, %c0_4] : memref<1x128xf32, #tpu.memory_space<vmem>>, vector<1x128xf32>
    %4 = vector.broadcast %3 : vector<1x128xf32> to vector<16x128xf32>
    %5 = arith.addf %2, %4 : vector<16x128xf32>
    %cst_5 = arith.constant 5.000000e-01 : f32
    %6 = vector.broadcast %cst_5 : f32 to vector<16x128xf32>
    %7 = arith.mulf %6, %5 : vector<16x128xf32>
    %cst_6 = arith.constant 0.707106769 : f32
    %8 = vector.broadcast %cst_6 : f32 to vector<16x128xf32>
    %9 = arith.mulf %5, %8 : vector<16x128xf32>
    %10 = math.absf %9 : vector<16x128xf32>
    %cst_7 = arith.constant 0.327591091 : f32
    %11 = vector.broadcast %cst_7 : f32 to vector<16x128xf32>
    %12 = arith.mulf %11, %10 : vector<16x128xf32>
    %cst_8 = arith.constant 1.000000e+00 : f32
    %13 = vector.broadcast %cst_8 : f32 to vector<16x128xf32>
    %14 = arith.addf %13, %12 : vector<16x128xf32>
    %cst_9 = arith.constant 1.000000e+00 : f32
    %15 = vector.broadcast %cst_9 : f32 to vector<16x128xf32>
    %16 = arith.divf %15, %14 : vector<16x128xf32>
    %cst_10 = arith.constant 1.06140542 : f32
    %17 = vector.broadcast %cst_10 : f32 to vector<16x128xf32>
    %18 = arith.mulf %17, %16 : vector<16x128xf32>
    %cst_11 = arith.constant -1.45315206 : f32
    %19 = vector.broadcast %cst_11 : f32 to vector<16x128xf32>
    %20 = arith.addf %18, %19 : vector<16x128xf32>
    %21 = arith.mulf %20, %16 : vector<16x128xf32>
    %cst_12 = arith.constant 1.42141378 : f32
    %22 = vector.broadcast %cst_12 : f32 to vector<16x128xf32>
    %23 = arith.addf %21, %22 : vector<16x128xf32>
    %24 = arith.mulf %23, %16 : vector<16x128xf32>
    %cst_13 = arith.constant -0.284496725 : f32
    %25 = vector.broadcast %cst_13 : f32 to vector<16x128xf32>
    %26 = arith.addf %24, %25 : vector<16x128xf32>
    %27 = arith.mulf %26, %16 : vector<16x128xf32>
    %cst_14 = arith.constant 0.254829586 : f32
    %28 = vector.broadcast %cst_14 : f32 to vector<16x128xf32>
    %29 = arith.addf %27, %28 : vector<16x128xf32>
    %30 = arith.mulf %29, %16 : vector<16x128xf32>
    %cst_15 = arith.constant 0.000000e+00 : f32
    %31 = vector.broadcast %cst_15 : f32 to vector<16x128xf32>
    %32 = arith.subf %31, %10 : vector<16x128xf32>
    %33 = arith.mulf %32, %10 : vector<16x128xf32>
    %34 = math.exp %33 : vector<16x128xf32>
    %35 = arith.mulf %30, %34 : vector<16x128xf32>
    %cst_16 = arith.constant 1.000000e+00 : f32
    %36 = vector.broadcast %cst_16 : f32 to vector<16x128xf32>
    %37 = arith.subf %36, %35 : vector<16x128xf32>
    %cst_17 = arith.constant 0.000000e+00 : f32
    %38 = vector.broadcast %cst_17 : f32 to vector<16x128xf32>
    %39 = arith.cmpf olt, %9, %38 : vector<16x128xf32>
    %cst_18 = arith.constant 0.000000e+00 : f32
    %40 = vector.broadcast %cst_18 : f32 to vector<16x128xf32>
    %41 = arith.subf %40, %37 : vector<16x128xf32>
    %42 = arith.select %39, %41, %37 : vector<16x128xi1>, vector<16x128xf32>
    %cst_19 = arith.constant 1.000000e+00 : f32
    %43 = vector.broadcast %cst_19 : f32 to vector<16x128xf32>
    %44 = arith.addf %43, %42 : vector<16x128xf32>
    %45 = arith.mulf %7, %44 : vector<16x128xf32>
    %46 = arith.truncf %45 : vector<16x128xf32> to vector<16x128xbf16>
    %c0_20 = arith.constant 0 : index
    %c0_21 = arith.constant 0 : index
    %47 = vector.load %arg3[%c0_20, %c0_21] : memref<128x128xbf16, #tpu.memory_space<vmem>>, vector<128x128xbf16>
    %cst_22 = arith.constant dense<0.000000e+00> : vector<16x128xf32>
    %48 = tpu.matmul %46, %47, %cst_22 {dimension_numbers = #tpu.dot_dimension_numbers<[1], [0], [0], [1], [0, 0, 1, 1], [], []>} : vector<16x128xbf16>, vector<128x128xbf16>, vector<16x128xf32> -> vector<16x128xf32>
    %c0_23 = arith.constant 0 : index
    %c0_24 = arith.constant 0 : index
    %49 = vector.load %arg6[%c0_23, %c0_24] : memref<1x128xf32, #tpu.memory_space<vmem>>, vector<1x128xf32>
    %50 = vector.broadcast %49 : vector<1x128xf32> to vector<16x128xf32>
    %51 = arith.addf %48, %50 : vector<16x128xf32>
    %cst_25 = arith.constant 5.000000e-01 : f32
    %52 = vector.broadcast %cst_25 : f32 to vector<16x128xf32>
    %53 = arith.mulf %52, %51 : vector<16x128xf32>
    %cst_26 = arith.constant 0.707106769 : f32
    %54 = vector.broadcast %cst_26 : f32 to vector<16x128xf32>
    %55 = arith.mulf %51, %54 : vector<16x128xf32>
    %56 = math.absf %55 : vector<16x128xf32>
    %cst_27 = arith.constant 0.327591091 : f32
    %57 = vector.broadcast %cst_27 : f32 to vector<16x128xf32>
    %58 = arith.mulf %57, %56 : vector<16x128xf32>
    %cst_28 = arith.constant 1.000000e+00 : f32
    %59 = vector.broadcast %cst_28 : f32 to vector<16x128xf32>
    %60 = arith.addf %59, %58 : vector<16x128xf32>
    %cst_29 = arith.constant 1.000000e+00 : f32
    %61 = vector.broadcast %cst_29 : f32 to vector<16x128xf32>
    %62 = arith.divf %61, %60 : vector<16x128xf32>
    %cst_30 = arith.constant 1.06140542 : f32
    %63 = vector.broadcast %cst_30 : f32 to vector<16x128xf32>
    %64 = arith.mulf %63, %62 : vector<16x128xf32>
    %cst_31 = arith.constant -1.45315206 : f32
    %65 = vector.broadcast %cst_31 : f32 to vector<16x128xf32>
    %66 = arith.addf %64, %65 : vector<16x128xf32>
    %67 = arith.mulf %66, %62 : vector<16x128xf32>
    %cst_32 = arith.constant 1.42141378 : f32
    %68 = vector.broadcast %cst_32 : f32 to vector<16x128xf32>
    %69 = arith.addf %67, %68 : vector<16x128xf32>
    %70 = arith.mulf %69, %62 : vector<16x128xf32>
    %cst_33 = arith.constant -0.284496725 : f32
    %71 = vector.broadcast %cst_33 : f32 to vector<16x128xf32>
    %72 = arith.addf %70, %71 : vector<16x128xf32>
    %73 = arith.mulf %72, %62 : vector<16x128xf32>
    %cst_34 = arith.constant 0.254829586 : f32
    %74 = vector.broadcast %cst_34 : f32 to vector<16x128xf32>
    %75 = arith.addf %73, %74 : vector<16x128xf32>
    %76 = arith.mulf %75, %62 : vector<16x128xf32>
    %cst_35 = arith.constant 0.000000e+00 : f32
    %77 = vector.broadcast %cst_35 : f32 to vector<16x128xf32>
    %78 = arith.subf %77, %56 : vector<16x128xf32>
    %79 = arith.mulf %78, %56 : vector<16x128xf32>
    %80 = math.exp %79 : vector<16x128xf32>
    %81 = arith.mulf %76, %80 : vector<16x128xf32>
    %cst_36 = arith.constant 1.000000e+00 : f32
    %82 = vector.broadcast %cst_36 : f32 to vector<16x128xf32>
    %83 = arith.subf %82, %81 : vector<16x128xf32>
    %cst_37 = arith.constant 0.000000e+00 : f32
    %84 = vector.broadcast %cst_37 : f32 to vector<16x128xf32>
    %85 = arith.cmpf olt, %55, %84 : vector<16x128xf32>
    %cst_38 = arith.constant 0.000000e+00 : f32
    %86 = vector.broadcast %cst_38 : f32 to vector<16x128xf32>
    %87 = arith.subf %86, %83 : vector<16x128xf32>
    %88 = arith.select %85, %87, %83 : vector<16x128xi1>, vector<16x128xf32>
    %cst_39 = arith.constant 1.000000e+00 : f32
    %89 = vector.broadcast %cst_39 : f32 to vector<16x128xf32>
    %90 = arith.addf %89, %88 : vector<16x128xf32>
    %91 = arith.mulf %53, %90 : vector<16x128xf32>
    %92 = arith.truncf %91 : vector<16x128xf32> to vector<16x128xbf16>
    %c0_40 = arith.constant 0 : index
    %c0_41 = arith.constant 0 : index
    %93 = vector.load %arg4[%c0_40, %c0_41] : memref<128x128xbf16, #tpu.memory_space<vmem>>, vector<128x128xbf16>
    %cst_42 = arith.constant dense<0.000000e+00> : vector<16x128xf32>
    %94 = tpu.matmul %92, %93, %cst_42 {dimension_numbers = #tpu.dot_dimension_numbers<[1], [0], [0], [1], [0, 0, 1, 1], [], []>} : vector<16x128xbf16>, vector<128x128xbf16>, vector<16x128xf32> -> vector<16x128xf32>
    %c0_43 = arith.constant 0 : index
    %c0_44 = arith.constant 0 : index
    %95 = vector.load %arg7[%c0_43, %c0_44] : memref<1x128xf32, #tpu.memory_space<vmem>>, vector<1x128xf32>
    %96 = vector.broadcast %95 : vector<1x128xf32> to vector<16x128xf32>
    %97 = arith.addf %94, %96 : vector<16x128xf32>
    %c0_45 = arith.constant 0 : index
    %c0_46 = arith.constant 0 : index
    %98 = vector.load %arg8[%c0_45, %c0_46] : memref<16x128xf32, #tpu.memory_space<vmem>>, vector<16x128xf32>
    tpu.vector_store %arg8[%c0_45, %c0_46], %97 {strides = array<i32>} : memref<16x128xf32, #tpu.memory_space<vmem>>, vector<16x128xf32>,
    return
  }
  func.func @transform_0(%arg0: i32) -> (i32, i32) {
    %c0_i32 = arith.constant 0 : i32
    %c0_i32_0 = arith.constant 0 : i32
    return %arg0, %c0_i32 : i32, i32
  }
  func.func @transform_1(%arg0: i32) -> (i32, i32) {
    %c0_i32 = arith.constant 0 : i32
    %c0_i32_0 = arith.constant 0 : i32
    %c0_i32_1 = arith.constant 0 : i32
    return %c0_i32, %c0_i32_0 : i32, i32
  }
  func.func @transform_2(%arg0: i32) -> (i32, i32) {
    %c0_i32 = arith.constant 0 : i32
    %c0_i32_0 = arith.constant 0 : i32
    %c0_i32_1 = arith.constant 0 : i32
    return %c0_i32, %c0_i32_0 : i32, i32
  }
  func.func @transform_3(%arg0: i32) -> (i32, i32) {
    %c0_i32 = arith.constant 0 : i32
    %c0_i32_0 = arith.constant 0 : i32
    %c0_i32_1 = arith.constant 0 : i32
    return %c0_i32, %c0_i32_0 : i32, i32
  }
  func.func @transform_4(%arg0: i32) -> (i32, i32) {
    %c0_i32 = arith.constant 0 : i32
    %c0_i32_0 = arith.constant 0 : i32
    %c0_i32_1 = arith.constant 0 : i32
    return %c0_i32, %c0_i32_0 : i32, i32
  }
  func.func @transform_5(%arg0: i32) -> (i32, i32) {
    %c0_i32 = arith.constant 0 : i32
    %c0_i32_0 = arith.constant 0 : i32
    %c0_i32_1 = arith.constant 0 : i32
    return %c0_i32, %c0_i32_0 : i32, i32
  }
  func.func @transform_6(%arg0: i32) -> (i32, i32) {
    %c0_i32 = arith.constant 0 : i32
    %c0_i32_0 = arith.constant 0 : i32
    %c0_i32_1 = arith.constant 0 : i32
    return %c0_i32, %c0_i32_0 : i32, i32
  }
  func.func @transform_7(%arg0: i32) -> (i32, i32) {
    %c0_i32 = arith.constant 0 : i32
    %c0_i32_0 = arith.constant 0 : i32
    return %arg0, %c0_i32 : i32, i32
  }
}

</mosaic_0001>

<llo_original>
// kernel: tpu_custom_call.1
$region0: #{tpu_custom_call.1}
  #allocation0 [shape = 'u32[]', space=smem, size = 0x4, offset = 0x4, fixed_abs, tag = 'smem constant byte address 0x4 - core index']
  #allocation1 [shape = 'u32[144,128]{1,0:T(1,128)}', space=vmem, size = 0x12000, scoped, tag = 'internal scratch']
  %s0 = inlined_call_operand.hbm [shape: bf16[16,128], index: 0, kind: input, shape index: {}]
  %s1 = inlined_call_operand.hbm [shape: bf16[128,128], index: 1, kind: input, shape index: {}]
  %s2 = inlined_call_operand.hbm [shape: bf16[128,128], index: 2, kind: input, shape index: {}]
  %s3 = inlined_call_operand.hbm [shape: bf16[128,128], index: 3, kind: input, shape index: {}]
  %s4 = inlined_call_operand.vmem [shape: f32[1,128], index: 4, kind: input, shape index: {}]
  %s5 = inlined_call_operand.vmem [shape: f32[1,128], index: 5, kind: input, shape index: {}]
  %s6 = inlined_call_operand.vmem [shape: f32[1,128], index: 6, kind: input, shape index: {}]
  %s7 = inlined_call_operand.hbm [shape: f32[16,128], index: 7, kind: output, shape index: {}]
  %s8 = sld [smem:[#allocation0]]
  $region54: #{tpu_custom_call.1} parent=0
    _
  %s10 = ssub.s32 1, %s8
  %s11 = scalar_select 0, %s10, %s8
  $region1: #{tpu_custom_call.1} parent=0
    #allocation2 [shape = 'u8[4096]{0}', space=vmem, size = 0x1000, scoped, tag = 'input window, operand 0, single buffered']
    #allocation3 [shape = 's32[1]{0}', space=sflag, size = 0x4, scoped, tag = 'scoped memory for tpu_custom_call.1']
    #allocation4 [shape = 's32[1]{0}', space=sflag, size = 0x4, scoped, tag = 'scoped memory for tpu_custom_call.1']
    #allocation5 [shape = 'u8[32768]{0}', space=vmem, size = 0x8000, scoped, tag = 'input window, operand 1, single buffered']
    #allocation6 [shape = 's32[1]{0}', space=sflag, size = 0x4, scoped, tag = 'scoped memory for tpu_custom_call.1']
    #allocation7 [shape = 'u8[32768]{0}', space=vmem, size = 0x8000, scoped, tag = 'input window, operand 2, single buffered']
    #allocation8 [shape = 'u8[32768]{0}', space=vmem, size = 0x8000, scoped, tag = 'input window, operand 3, single buffered']
    #allocation9 [shape = 's32[1]{0}', space=sflag, size = 0x4, scoped, tag = 'scoped memory for tpu_custom_call.1']
    #allocation10 [shape = 'u8[8192]{0}', space=vmem, size = 0x2000, scoped, tag = 'output window, operand 0, single buffered']
    %12 = vsyncpa [#allocation3], 0
    %13 = vsyncpa [#allocation6], 0
    %14 = vsyncpa [#allocation9], 0
    %15 = vsyncpa [#allocation4], 0
    // Predicated region
    $region2: #{tpu_custom_call.1} parent=1 // pred_check
      _
    $region3: #{tpu_custom_call.1} parent=1 // pred_check_branch
      %17 = sbr.rel (0) target = $region5
    $region4: #{tpu_custom_call.1} parent=1 // pred_region
      %s19 = ssub.s32 128, 128
      %20 = vsyncadd [#allocation3], %s19
      %s21 = sshll.u32 [#allocation2], 4
      %s22 = int_to_ptr.vmem [resolvable:$true] %s21
      %27 = dma.hbm_to_vmem [thread:$0]  %s0, 128, %s22, [#allocation3], 64, 64, 4
    $region5: #{tpu_custom_call.1} parent=1 // pred_fallthru
      _
    // Predicated region
    $region6: #{tpu_custom_call.1} parent=1 // pred_check
      _
    $region7: #{tpu_custom_call.1} parent=1 // pred_check_branch
      %29 = sbr.rel (0) target = $region9
    $region8: #{tpu_custom_call.1} parent=1 // pred_region
      %s31 = ssub.s32 1024, 1024
      %32 = vsyncadd [#allocation6], %s31
      %s33 = sshll.u32 [#allocation5], 4
      %s34 = int_to_ptr.vmem [resolvable:$true] %s33
      %39 = dma.hbm_to_vmem [thread:$0]  %s1, 1024, %s34, [#allocation6], 64, 64, 4
    $region9: #{tpu_custom_call.1} parent=1 // pred_fallthru
      _
    // Predicated region
    $region10: #{tpu_custom_call.1} parent=1 // pred_check
      _
    $region11: #{tpu_custom_call.1} parent=1 // pred_check_branch
      %41 = sbr.rel (0) target = $region13
    $region12: #{tpu_custom_call.1} parent=1 // pred_region
      %s43 = ssub.s32 1024, 1024
      %44 = vsyncadd [#allocation6], %s43
      %s45 = sshll.u32 [#allocation7], 4
      %s46 = int_to_ptr.vmem [resolvable:$true] %s45
      %51 = dma.hbm_to_vmem [thread:$0]  %s2, 1024, %s46, [#allocation6], 64, 64, 4
    $region13: #{tpu_custom_call.1} parent=1 // pred_fallthru
      _
    // Predicated region
    $region14: #{tpu_custom_call.1} parent=1 // pred_check
      _
    $region15: #{tpu_custom_call.1} parent=1 // pred_check_branch
      %53 = sbr.rel (0) target = $region17
    $region16: #{tpu_custom_call.1} parent=1 // pred_region
      %s55 = ssub.s32 1024, 1024
      %56 = vsyncadd [#allocation9], %s55
      %s57 = sshll.u32 [#allocation8], 4
      %s58 = int_to_ptr.vmem [resolvable:$true] %s57
      %63 = dma.hbm_to_vmem [thread:$0]  %s3, 1024, %s58, [#allocation9], 64, 64, 4
    $region17: #{tpu_custom_call.1} parent=1 // pred_fallthru
      _
    // Predicated region
    $region18: #{tpu_custom_call.1} parent=1 // pred_check
      _
    $region19: #{tpu_custom_call.1} parent=1 // pred_check_branch
      %65 = sbr.rel (0) target = $region21
    $region20: #{tpu_custom_call.1} parent=1 // pred_region
      _
    $region21: #{tpu_custom_call.1} parent=1 // pred_fallthru
      _
    // Predicated region
    $region22: #{tpu_custom_call.1} parent=1 // pred_check
      _
    $region23: #{tpu_custom_call.1} parent=1 // pred_check_branch
      %67 = sbr.rel (0) target = $region25
    $region24: #{tpu_custom_call.1} parent=1 // pred_region
      _
    $region25: #{tpu_custom_call.1} parent=1 // pred_fallthru
      _
    // Predicated region
    $region26: #{tpu_custom_call.1} parent=1 // pred_check
      _
    $region27: #{tpu_custom_call.1} parent=1 // pred_check_branch
      %69 = sbr.rel (0) target = $region29
    $region28: #{tpu_custom_call.1} parent=1 // pred_region
      _
    $region29: #{tpu_custom_call.1} parent=1 // pred_fallthru
      _
    // Predicated region
    $region30: #{tpu_custom_call.1} parent=1 // pred_check
      _
    $region31: #{tpu_custom_call.1} parent=1 // pred_check_branch
      %71 = sbr.rel (0) target = $region33
    $region32: #{tpu_custom_call.1} parent=1 // pred_region
      %72 = dma.done [#allocation3], 128
    $region33: #{tpu_custom_call.1} parent=1 // pred_fallthru
      _
    // Predicated region
    $region34: #{tpu_custom_call.1} parent=1 // pred_check
      _
    $region35: #{tpu_custom_call.1} parent=1 // pred_check_branch
      %74 = sbr.rel (0) target = $region37
    $region36: #{tpu_custom_call.1} parent=1 // pred_region
      %75 = dma.done [#allocation6], 1024
    $region37: #{tpu_custom_call.1} parent=1 // pred_fallthru
      _
    // Predicated region
    $region38: #{tpu_custom_call.1} parent=1 // pred_check
      _
    $region39: #{tpu_custom_call.1} parent=1 // pred_check_branch
      %77 = sbr.rel (0) target = $region41
    $region40: #{tpu_custom_call.1} parent=1 // pred_region
      %78 = dma.done [#allocation6], 1024
    $region41: #{tpu_custom_call.1} parent=1 // pred_fallthru
      _
    // Predicated region
    $region42: #{tpu_custom_call.1} parent=1 // pred_check
      _
    $region43: #{tpu_custom_call.1} parent=1 // pred_check_branch
      %80 = sbr.rel (0) target = $region45
    $region44: #{tpu_custom_call.1} parent=1 // pred_region
      %81 = dma.done [#allocation9], 1024
    $region45: #{tpu_custom_call.1} parent=1 // pred_fallthru
      _
    %v83 = vld [vmem:[#allocation2] sm:$0xf]
    %v84 = vld [vmem:[#allocation2 + $0x4] sm:$0xf]
    %v85 = vld [vmem:[#allocation5] sm:$0xf]
    %v86 = vld [vmem:[#allocation5 + $0x4] sm:$0xf]
    %v87 = vld [vmem:[#allocation5 + $0x8] sm:$0xf]
    %v88 = vld [vmem:[#allocation5 + $0xc] sm:$0xf]
    %v89 = vld [vmem:[#allocation5 + $0x10] sm:$0xf]
    %v90 = vld [vmem:[#allocation5 + $0x14] sm:$0xf]
    %v91 = vld [vmem:[#allocation5 + $0x18] sm:$0xf]
    %v92 = vld [vmem:[#allocation5 + $0x1c] sm:$0xf]
    %v93 = vld [vmem:[#allocation5 + $0x20] sm:$0xf]
    %v94 = vld [vmem:[#allocation5 + $0x24] sm:$0xf]
    %v95 = vld [vmem:[#allocation5 + $0x28] sm:$0xf]
    %v96 = vld [vmem:[#allocation5 + $0x2c] sm:$0xf]
    %v97 = vld [vmem:[#allocation5 + $0x30] sm:$0xf]
    %v98 = vld [vmem:[#allocation5 + $0x34] sm:$0xf]
    %v99 = vld [vmem:[#allocation5 + $0x38] sm:$0xf]
    %v100 = vld [vmem:[#allocation5 + $0x3c] sm:$0xf]
    %v101 = vld [vmem:[%s4] sm:$0x1]
    %v103 = vlaneseq
    %v104 = vshrl.u32 %v103, 7
    %v105 = vsub.s32 0, %v104
    %v106 = vrot.slane %v101, %v105
    %v110 = vunpack.c.l.b16 %v83
    %v111 = vunpack.c.l.b16 %v84
    %v112 = vpack.c.b16 %v111, %v110
    %v130 = vunpack.c.l.b16 %v85
    %v131 = vunpack.c.l.b16 %v86
    %v132 = vunpack.c.l.b16 %v87
    %v133 = vunpack.c.l.b16 %v88
    %v134 = vunpack.c.l.b16 %v89
    %v135 = vunpack.c.l.b16 %v90
    %v136 = vunpack.c.l.b16 %v91
    %v137 = vunpack.c.l.b16 %v92
    %v138 = vunpack.c.l.b16 %v93
    %v139 = vunpack.c.l.b16 %v94
    %v140 = vunpack.c.l.b16 %v95
    %v141 = vunpack.c.l.b16 %v96
    %v142 = vunpack.c.l.b16 %v97
    %v143 = vunpack.c.l.b16 %v98
    %v144 = vunpack.c.l.b16 %v99
    %v145 = vunpack.c.l.b16 %v100
    %v146 = vpack.c.b16 %v131, %v130
    %v147 = vpack.c.b16 %v133, %v132
    %v148 = vpack.c.b16 %v135, %v134
    %v149 = vpack.c.b16 %v137, %v136
    %v150 = vpack.c.b16 %v139, %v138
    %v151 = vpack.c.b16 %v141, %v140
    %v152 = vpack.c.b16 %v143, %v142
    %v153 = vpack.c.b16 %v145, %v144
    %162 = vmatprep.subr.bf16.mxu0 0
    %163 = vmatpush1.bf16.msra.mxu0 %v153
    %164 = vmatprep.subr.bf16.mxu0 0
    %165 = vmatpush1.bf16.msra.mxu0 %v152
    %166 = vmatprep.subr.bf16.mxu0 0
    %167 = vmatpush1.bf16.msra.mxu0 %v151
    %168 = vmatprep.subr.bf16.mxu0 0
    %169 = vmatpush1.bf16.msra.mxu0 %v150
    %170 = vmatprep.subr.bf16.mxu0 0
    %171 = vmatpush1.bf16.msra.mxu0 %v149
    %172 = vmatprep.subr.bf16.mxu0 0
    %173 = vmatpush1.bf16.msra.mxu0 %v148
    %174 = vmatprep.subr.bf16.mxu0 0
    %175 = vmatpush1.bf16.msra.mxu0 %v147
    %176 = vmatprep.subr.bf16.mxu0 0
    %177 = vmatpush1.bf16.msra.mxu0 %v146
    %178 = vmatprep.subr.bf16.mxu0 0
    %179 = vmatpush2.bf16.msra.mxu0 0
    %180 = vmatprep.subr.bf16.mxu0 0
    %181 = vmatpush2.bf16.msra.mxu0 0
    %182 = vmatprep.subr.bf16.mxu0 0
    %183 = vmatpush2.bf16.msra.mxu0 0
    %184 = vmatprep.subr.bf16.mxu0 0
    %185 = vmatpush2.bf16.msra.mxu0 0
    %186 = vmatprep.subr.bf16.mxu0 0
    %187 = vmatpush2.bf16.msra.mxu0 0
    %188 = vmatprep.subr.bf16.mxu0 0
    %189 = vmatpush2.bf16.msra.mxu0 0
    %190 = vmatprep.subr.bf16.mxu0 0
    %191 = vmatpush2.bf16.msra.mxu0 0
    %192 = vmatprep.subr.bf16.mxu0 0
    %193 = vmatpush2.bf16.msra.mxu0 0
    %194 = vmatprep.mubr.bf16.mxu0 0
    %195 = vmatmul.mubr.bf16.gmra.mxu0 %v112
    %v196 = vpop.f32.mrf.mxu0
    %v197 = vadd.f32 %v106, %v196
    %v198 = vpop.f32.mrf.mxu0
    %v199 = vpop.f32.mrf.mxu0
    %v200 = vadd.f32 %v106, %v199
    %v201 = vpop.f32.mrf.mxu0
    %202 = vdwg.mxu0
    %v203 = vmul.f32 %v197, 0.5
    %v204 = vmul.f32 %v200, 0.5
    %v205 = vmul.f32 %v197, 0.70710677
    %v206 = vmul.f32 %v200, 0.70710677
    %v207 = vand.u32 2147483647, %v205
    %v208 = vand.u32 2147483647, %v206
    %v209 = vmul.f32 %v207, 0.3275911
    %v210 = vmul.f32 %v208, 0.3275911
    %v211 = vadd.f32 %v209, 1.0
    %v212 = vadd.f32 %v210, 1.0
    %v213 = vrcp.pop %v211
    %v214 = vmul.f32 1.0, %v213
    %v215 = vrcp.pop %v212
    %v216 = vmul.f32 1.0, %v215
    %v217 = vmul.f32 %v214, 1.0614054
    %v218 = vmul.f32 %v216, 1.0614054
    %v219 = vadd.f32 %v217, -1.4531521
    %v220 = vadd.f32 %v218, -1.4531521
    %v221 = vmul.f32 %v219, %v214
    %v222 = vmul.f32 %v220, %v216
    %v223 = vadd.f32 %v221, 1.4214138
    %v224 = vadd.f32 %v222, 1.4214138
    %v225 = vmul.f32 %v223, %v214
    %v226 = vmul.f32 %v224, %v216
    %v227 = vadd.f32 %v225, -0.28449672
    %v228 = vadd.f32 %v226, -0.28449672
    %v229 = vmul.f32 %v227, %v214
    %v230 = vmul.f32 %v228, %v216
    %v231 = vadd.f32 %v229, 0.2548296
    %v232 = vadd.f32 %v230, 0.2548296
    %v233 = vmul.f32 %v231, %v214
    %v234 = vmul.f32 %v232, %v216
    %v235 = vsub.f32 0.0, %v207
    %v236 = vsub.f32 0.0, %v208
    %v237 = vmul.f32 %v235, %v207
    %v238 = vmul.f32 %v236, %v208
    %v239 = vmul.f32 %v237, 1.442695
    %v240 = vpow.pop %v239
    %v241 = vmul.f32 %v238, 1.442695
    %v242 = vpow.pop %v241
    %v243 = vmul.f32 %v233, %v240
    %v244 = vmul.f32 %v234, %v242
    %v245 = vsub.f32 1.0, %v243
    %v246 = vsub.f32 1.0, %v244
    %vm247 = vcmp.lt.f32.partialorder %v205, 0.0
    %vm248 = vcmp.lt.f32.partialorder %v206, 0.0
    %v249 = vsub.f32 0.0, %v245
    %v250 = vsub.f32 0.0, %v246
    %v251 = vsel %vm247, %v249, %v245
    %v252 = vsel %vm248, %v250, %v246
    %v253 = vadd.f32 %v251, 1.0
    %v254 = vadd.f32 %v252, 1.0
    %v255 = vmul.f32 %v203, %v253
    %v256 = vmul.f32 %v204, %v254
    %v257 = vpack.c.bf16 %v256, %v255
    %v258 = vld [vmem:[#allocation7] sm:$0xf]
    %v259 = vld [vmem:[#allocation7 + $0x4] sm:$0xf]
    %v260 = vld [vmem:[#allocation7 + $0x8] sm:$0xf]
    %v261 = vld [vmem:[#allocation7 + $0xc] sm:$0xf]
    %v262 = vld [vmem:[#allocation7 + $0x10] sm:$0xf]
    %v263 = vld [vmem:[#allocation7 + $0x14] sm:$0xf]
    %v264 = vld [vmem:[#allocation7 + $0x18] sm:$0xf]
    %v265 = vld [vmem:[#allocation7 + $0x1c] sm:$0xf]
    %v266 = vld [vmem:[#allocation7 + $0x20] sm:$0xf]
    %v267 = vld [vmem:[#allocation7 + $0x24] sm:$0xf]
    %v268 = vld [vmem:[#allocation7 + $0x28] sm:$0xf]
    %v269 = vld [vmem:[#allocation7 + $0x2c] sm:$0xf]
    %v270 = vld [vmem:[#allocation7 + $0x30] sm:$0xf]
    %v271 = vld [vmem:[#allocation7 + $0x34] sm:$0xf]
    %v272 = vld [vmem:[#allocation7 + $0x38] sm:$0xf]
    %v273 = vld [vmem:[#allocation7 + $0x3c] sm:$0xf]
    %v274 = vld [vmem:[%s5] sm:$0x1]
    %v276 = vlaneseq
    %v277 = vshrl.u32 %v276, 7
    %v278 = vsub.s32 0, %v277
    %v279 = vrot.slane %v274, %v278
    %v297 = vunpack.c.l.b16 %v258
    %v298 = vunpack.c.l.b16 %v259
    %v299 = vunpack.c.l.b16 %v260
    %v300 = vunpack.c.l.b16 %v261
    %v301 = vunpack.c.l.b16 %v262
    %v302 = vunpack.c.l.b16 %v263
    %v303 = vunpack.c.l.b16 %v264
    %v304 = vunpack.c.l.b16 %v265
    %v305 = vunpack.c.l.b16 %v266
    %v306 = vunpack.c.l.b16 %v267
    %v307 = vunpack.c.l.b16 %v268
    %v308 = vunpack.c.l.b16 %v269
    %v309 = vunpack.c.l.b16 %v270
    %v310 = vunpack.c.l.b16 %v271
    %v311 = vunpack.c.l.b16 %v272
    %v312 = vunpack.c.l.b16 %v273
    %v313 = vpack.c.b16 %v298, %v297
    %v314 = vpack.c.b16 %v300, %v299
    %v315 = vpack.c.b16 %v302, %v301
    %v316 = vpack.c.b16 %v304, %v303
    %v317 = vpack.c.b16 %v306, %v305
    %v318 = vpack.c.b16 %v308, %v307
    %v319 = vpack.c.b16 %v310, %v309
    %v320 = vpack.c.b16 %v312, %v311
    %329 = vmatprep.subr.bf16.mxu0 0
    %330 = vmatpush1.bf16.msra.mxu0 %v320
    %331 = vmatprep.subr.bf16.mxu0 0
    %332 = vmatpush1.bf16.msra.mxu0 %v319
    %333 = vmatprep.subr.bf16.mxu0 0
    %334 = vmatpush1.bf16.msra.mxu0 %v318
    %335 = vmatprep.subr.bf16.mxu0 0
    %336 = vmatpush1.bf16.msra.mxu0 %v317
    %337 = vmatprep.subr.bf16.mxu0 0
    %338 = vmatpush1.bf16.msra.mxu0 %v316
    %339 = vmatprep.subr.bf16.mxu0 0
    %340 = vmatpush1.bf16.msra.mxu0 %v315
    %341 = vmatprep.subr.bf16.mxu0 0
    %342 = vmatpush1.bf16.msra.mxu0 %v314
    %343 = vmatprep.subr.bf16.mxu0 0
    %344 = vmatpush1.bf16.msra.mxu0 %v313
    %345 = vmatprep.subr.bf16.mxu0 0
    %346 = vmatpush2.bf16.msra.mxu0 0
    %347 = vmatprep.subr.bf16.mxu0 0
    %348 = vmatpush2.bf16.msra.mxu0 0
    %349 = vmatprep.subr.bf16.mxu0 0
    %350 = vmatpush2.bf16.msra.mxu0 0
    %351 = vmatprep.subr.bf16.mxu0 0
    %352 = vmatpush2.bf16.msra.mxu0 0
    %353 = vmatprep.subr.bf16.mxu0 0
    %354 = vmatpush2.bf16.msra.mxu0 0
    %355 = vmatprep.subr.bf16.mxu0 0
    %356 = vmatpush2.bf16.msra.mxu0 0
    %357 = vmatprep.subr.bf16.mxu0 0
    %358 = vmatpush2.bf16.msra.mxu0 0
    %359 = vmatprep.subr.bf16.mxu0 0
    %360 = vmatpush2.bf16.msra.mxu0 0
    %361 = vmatprep.mubr.bf16.mxu0 0
    %362 = vmatmul.mubr.bf16.gmra.mxu0 %v257
    %v363 = vpop.f32.mrf.mxu0
    %v364 = vadd.f32 %v279, %v363
    %v365 = vpop.f32.mrf.mxu0
    %v366 = vpop.f32.mrf.mxu0
    %v367 = vadd.f32 %v279, %v366
    %v368 = vpop.f32.mrf.mxu0
    %369 = vdwg.mxu0
    %v370 = vmul.f32 %v364, 0.5
    %v371 = vmul.f32 %v367, 0.5
    %v372 = vmul.f32 %v364, 0.70710677
    %v373 = vmul.f32 %v367, 0.70710677
    %v374 = vand.u32 2147483647, %v372
    %v375 = vand.u32 2147483647, %v373
    %v376 = vmul.f32 %v374, 0.3275911
    %v377 = vmul.f32 %v375, 0.3275911
    %v378 = vadd.f32 %v376, 1.0
    %v379 = vadd.f32 %v377, 1.0
    %v380 = vrcp.pop %v378
    %v381 = vmul.f32 1.0, %v380
    %v382 = vrcp.pop %v379
    %v383 = vmul.f32 1.0, %v382
    %v384 = vmul.f32 %v381, 1.0614054
    %v385 = vmul.f32 %v383, 1.0614054
    %v386 = vadd.f32 %v384, -1.4531521
    %v387 = vadd.f32 %v385, -1.4531521
    %v388 = vmul.f32 %v386, %v381
    %v389 = vmul.f32 %v387, %v383
    %v390 = vadd.f32 %v388, 1.4214138
    %v391 = vadd.f32 %v389, 1.4214138
    %v392 = vmul.f32 %v390, %v381
    %v393 = vmul.f32 %v391, %v383
    %v394 = vadd.f32 %v392, -0.28449672
    %v395 = vadd.f32 %v393, -0.28449672
    %v396 = vmul.f32 %v394, %v381
    %v397 = vmul.f32 %v395, %v383
    %v398 = vadd.f32 %v396, 0.2548296
    %v399 = vadd.f32 %v397, 0.2548296
    %v400 = vmul.f32 %v398, %v381
    %v401 = vmul.f32 %v399, %v383
    %v402 = vsub.f32 0.0, %v374
    %v403 = vsub.f32 0.0, %v375
    %v404 = vmul.f32 %v402, %v374
    %v405 = vmul.f32 %v403, %v375
    %v406 = vmul.f32 %v404, 1.442695
    %v407 = vpow.pop %v406
    %v408 = vmul.f32 %v405, 1.442695
    %v409 = vpow.pop %v408
    %v410 = vmul.f32 %v400, %v407
    %v411 = vmul.f32 %v401, %v409
    %v412 = vsub.f32 1.0, %v410
    %v413 = vsub.f32 1.0, %v411
    %vm414 = vcmp.lt.f32.partialorder %v372, 0.0
    %vm415 = vcmp.lt.f32.partialorder %v373, 0.0
    %v416 = vsub.f32 0.0, %v412
    %v417 = vsub.f32 0.0, %v413
    %v418 = vsel %vm414, %v416, %v412
    %v419 = vsel %vm415, %v417, %v413
    %v420 = vadd.f32 %v418, 1.0
    %v421 = vadd.f32 %v419, 1.0
    %v422 = vmul.f32 %v370, %v420
    %v423 = vmul.f32 %v371, %v421
    %v424 = vpack.c.bf16 %v423, %v422
    %v425 = vld [vmem:[#allocation8] sm:$0xf]
    %v426 = vld [vmem:[#allocation8 + $0x4] sm:$0xf]
    %v427 = vld [vmem:[#allocation8 + $0x8] sm:$0xf]
    %v428 = vld [vmem:[#allocation8 + $0xc] sm:$0xf]
    %v429 = vld [vmem:[#allocation8 + $0x10] sm:$0xf]
    %v430 = vld [vmem:[#allocation8 + $0x14] sm:$0xf]
    %v431 = vld [vmem:[#allocation8 + $0x18] sm:$0xf]
    %v432 = vld [vmem:[#allocation8 + $0x1c] sm:$0xf]
    %v433 = vld [vmem:[#allocation8 + $0x20] sm:$0xf]
    %v434 = vld [vmem:[#allocation8 + $0x24] sm:$0xf]
    %v435 = vld [vmem:[#allocation8 + $0x28] sm:$0xf]
    %v436 = vld [vmem:[#allocation8 + $0x2c] sm:$0xf]
    %v437 = vld [vmem:[#allocation8 + $0x30] sm:$0xf]
    %v438 = vld [vmem:[#allocation8 + $0x34] sm:$0xf]
    %v439 = vld [vmem:[#allocation8 + $0x38] sm:$0xf]
    %v440 = vld [vmem:[#allocation8 + $0x3c] sm:$0xf]
    %v441 = vld [vmem:[%s6] sm:$0x1]
    %v443 = vlaneseq
    %v444 = vshrl.u32 %v443, 7
    %v445 = vsub.s32 0, %v444
    %v446 = vrot.slane %v441, %v445
    %v464 = vunpack.c.l.b16 %v425
    %v465 = vunpack.c.l.b16 %v426
    %v466 = vunpack.c.l.b16 %v427
    %v467 = vunpack.c.l.b16 %v428
    %v468 = vunpack.c.l.b16 %v429
    %v469 = vunpack.c.l.b16 %v430
    %v470 = vunpack.c.l.b16 %v431
    %v471 = vunpack.c.l.b16 %v432
    %v472 = vunpack.c.l.b16 %v433
    %v473 = vunpack.c.l.b16 %v434
    %v474 = vunpack.c.l.b16 %v435
    %v475 = vunpack.c.l.b16 %v436
    %v476 = vunpack.c.l.b16 %v437
    %v477 = vunpack.c.l.b16 %v438
    %v478 = vunpack.c.l.b16 %v439
    %v479 = vunpack.c.l.b16 %v440
    %v480 = vpack.c.b16 %v465, %v464
    %v481 = vpack.c.b16 %v467, %v466
    %v482 = vpack.c.b16 %v469, %v468
    %v483 = vpack.c.b16 %v471, %v470
    %v484 = vpack.c.b16 %v473, %v472
    %v485 = vpack.c.b16 %v475, %v474
    %v486 = vpack.c.b16 %v477, %v476
    %v487 = vpack.c.b16 %v479, %v478
    %496 = vmatprep.subr.bf16.mxu0 0
    %497 = vmatpush1.bf16.msra.mxu0 %v487
    %498 = vmatprep.subr.bf16.mxu0 0
    %499 = vmatpush1.bf16.msra.mxu0 %v486
    %500 = vmatprep.subr.bf16.mxu0 0
    %501 = vmatpush1.bf16.msra.mxu0 %v485
    %502 = vmatprep.subr.bf16.mxu0 0
    %503 = vmatpush1.bf16.msra.mxu0 %v484
    %504 = vmatprep.subr.bf16.mxu0 0
    %505 = vmatpush1.bf16.msra.mxu0 %v483
    %506 = vmatprep.subr.bf16.mxu0 0
    %507 = vmatpush1.bf16.msra.mxu0 %v482
    %508 = vmatprep.subr.bf16.mxu0 0
    %509 = vmatpush1.bf16.msra.mxu0 %v481
    %510 = vmatprep.subr.bf16.mxu0 0
    %511 = vmatpush1.bf16.msra.mxu0 %v480
    %512 = vmatprep.subr.bf16.mxu0 0
    %513 = vmatpush2.bf16.msra.mxu0 0
    %514 = vmatprep.subr.bf16.mxu0 0
    %515 = vmatpush2.bf16.msra.mxu0 0
    %516 = vmatprep.subr.bf16.mxu0 0
    %517 = vmatpush2.bf16.msra.mxu0 0
    %518 = vmatprep.subr.bf16.mxu0 0
    %519 = vmatpush2.bf16.msra.mxu0 0
    %520 = vmatprep.subr.bf16.mxu0 0
    %521 = vmatpush2.bf16.msra.mxu0 0
    %522 = vmatprep.subr.bf16.mxu0 0
    %523 = vmatpush2.bf16.msra.mxu0 0
    %524 = vmatprep.subr.bf16.mxu0 0
    %525 = vmatpush2.bf16.msra.mxu0 0
    %526 = vmatprep.subr.bf16.mxu0 0
    %527 = vmatpush2.bf16.msra.mxu0 0
    %528 = vmatprep.mubr.bf16.mxu0 0
    %529 = vmatmul.mubr.bf16.gmra.mxu0 %v424
    %v530 = vpop.f32.mrf.mxu0
    %v531 = vadd.f32 %v446, %v530
    %v532 = vpop.f32.mrf.mxu0
    %v533 = vpop.f32.mrf.mxu0
    %v534 = vadd.f32 %v446, %v533
    %v535 = vpop.f32.mrf.mxu0
    %536 = vdwg.mxu0
    %537 = vst [vmem:[#allocation10] sm:$0xff] %v531
    %538 = vst [vmem:[#allocation10 + $0x8] sm:$0xff] %v534
    // Predicated region
    $region46: #{tpu_custom_call.1} parent=1 // pred_check
      _
    $region47: #{tpu_custom_call.1} parent=1 // pred_check_branch
      %540 = sbr.rel (0) target = $region49
    $region48: #{tpu_custom_call.1} parent=1 // pred_region
      %s542 = ssub.s32 256, 256
      %543 = vsyncadd [#allocation4], %s542
      %s544 = sshll.u32 [#allocation10], 4
      %s545 = int_to_ptr.vmem [resolvable:$true] %s544
      %550 = dma.vmem_to_hbm [thread:$0]  %s545, 256, %s7, [#allocation4], 128, 128, 8
    $region49: #{tpu_custom_call.1} parent=1 // pred_fallthru
      _
    // Predicated region
    $region50: #{tpu_custom_call.1} parent=1 // pred_check
      _
    $region51: #{tpu_custom_call.1} parent=1 // pred_check_branch
      %552 = sbr.rel (0) target = $region53
    $region52: #{tpu_custom_call.1} parent=1 // pred_region
      %553 = dma.done [#allocation4], 256
    $region53: #{tpu_custom_call.1} parent=1 // pred_fallthru
      _
    %554 = vsyncpa [#allocation3], 1
    %555 = vsyncpa [#allocation6], 1
    %556 = vsyncpa [#allocation9], 1
    %557 = vsyncpa [#allocation4], 1

</llo_original>
